<compile_context>
chip_gen: v6e
topology: v6e:2x2x1
jax: 0.10.0
libtpu: 0.0.40
codegen_flags: <defaults>
</compile_context>

<pallas_src>
import functools

import jax
import jax.numpy as jnp
from jax.experimental import pallas as pl
from jax.experimental.pallas import tpu as pltpu


def _conv_relu_kernel(x_ref, w_ref, b_ref, o_ref, *, pad, ksz):
    # x_ref: (Bb, W, K)        input block, (batch, time, feature) layout (no permutes)
    # w_ref: (ksz*K, K)        flattened conv taps, w_ref[k*K + c, o] = torch_weight[o, c, k]
    # b_ref: (1, K)            conv bias
    # o_ref: (Bb, Lout, K)     output block, already in the torch output layout
    Bb, W, K = x_ref.shape
    Lout = o_ref.shape[1]

    x = x_ref[...]                                        # (Bb, W, K), f32

    # nn.ConstantPad1d((ks-1)//2, 0.) on the time axis, done purely in registers.
    if pad > 0:
        zpad = jnp.zeros((Bb, pad, K), x.dtype)
        xpad = jnp.concatenate([zpad, x, zpad], axis=1)   # (Bb, W + 2*pad, K)
    else:
        xpad = x

    # im2col: stack the ksz shifted time slices along the feature axis.
    # cols[b, t, k*K + c] = xpad[b, t + k, c]
    cols = jnp.concatenate([xpad[:, k:k + Lout, :] for k in range(ksz)],
                           axis=-1)                       # (Bb, Lout, ksz*K)
    cols2d = cols.reshape(Bb * Lout, ksz * K)             # sublane-only reshape

    # One matmul for the whole block (f32 accumulation), then bias + ReLU + one store.
    acc = jnp.dot(cols2d, w_ref[...], preferred_element_type=jnp.float32)  # (Bb*Lout, K)
    out = jnp.maximum(acc + b_ref[...], 0.0)
    o_ref[...] = out.reshape(Bb, Lout, K).astype(o_ref.dtype)


def conv_layer_forward(x, conv_weight, conv_bias, *, kernel_size=7, block_b=None):
    """x: (B, W, K).  conv_weight: (K, K, ks-1) in torch Conv1d (out, in, k) layout.
    conv_bias: (K,).  Returns (B, Lout, K), Lout = W + 2*((ks-1)//2) - (ks-1) + 1."""
    B, W, K = x.shape
    ksz = kernel_size - 1
    pad = (kernel_size - 1) // 2
    Lout = W + 2 * pad - ksz + 1

    assert conv_weight.shape == (K, K, ksz)
    assert conv_bias.shape == (K,)

    x = x.astype(jnp.float32)
    # Pre-transpose + flatten the conv taps once so the kernel consumes the
    # (time, feature) layout directly: w_flat[k*K + c, o] = weight[o, c, k].
    w_flat = jnp.transpose(conv_weight, (2, 1, 0)).reshape(ksz * K, K).astype(jnp.float32)
    bias2d = conv_bias.reshape(1, K).astype(jnp.float32)

    if block_b is None or B % block_b != 0:
        # Single grid step: the kernel is latency/overhead-bound at these sizes and the
        # whole working set is a few KB, so there is no VMEM reason to split the batch.
        block_b = B
    grid = (B // block_b,)

    kernel = functools.partial(_conv_relu_kernel, pad=pad, ksz=ksz)
    out = pl.pallas_call(
        kernel,
        out_shape=jax.ShapeDtypeStruct((B, Lout, K), jnp.float32),
        grid_spec=pltpu.PrefetchScalarGridSpec(
            num_scalar_prefetch=0,
            grid=grid,
            in_specs=[
                pl.BlockSpec((block_b, W, K), lambda i: (i, 0, 0)),   # x block
                pl.BlockSpec((ksz * K, K), lambda i: (0, 0)),         # conv taps (const)
                pl.BlockSpec((1, K), lambda i: (0, 0)),               # bias (const)
            ],
            out_specs=pl.BlockSpec((block_b, Lout, K), lambda i: (i, 0, 0)),
        ),
        compiler_params=pltpu.CompilerParams(
            dimension_semantics=("arbitrary",)),
    )(x, w_flat, bias2d)
    return out


def _reference(x, conv_weight, conv_bias, kernel_size=7):
    """Pure-JAX replica of the PyTorch forward for checking."""
    B, W, K = x.shape
    ksz = kernel_size - 1
    pad = (kernel_size - 1) // 2
    Lout = W + 2 * pad - ksz + 1
    xp = jnp.transpose(x, (0, 2, 1))                                  # (B, K, W)
    xp = jnp.pad(xp, ((0, 0), (0, 0), (pad, pad)))                    # (B, K, W+2p)
    out = jnp.zeros((B, K, Lout), jnp.float32) + conv_bias[None, :, None]
    for k in range(ksz):
        out = out + jnp.einsum("oc,bct->bot", conv_weight[:, :, k],
                               xp[:, :, k:k + Lout],
                               precision=jax.lax.Precision.HIGHEST)
    out = jnp.maximum(out, 0.0)
    return jnp.transpose(out, (0, 2, 1))                              # (B, Lout, K)


if __name__ == "__main__":
    # Module config: n_features=4, window_size=16, kernel_size=7 (conv kernel = 6, pad = 3).
    B, W, K = 2, 16, 4
    kernel_size = 7
    ksz = kernel_size - 1
    pad = (kernel_size - 1) // 2
    Lout = W + 2 * pad - ksz + 1

    key = jax.random.PRNGKey(0)
    k_x, k_w, k_b = jax.random.split(key, 3)

    x = jax.random.normal(k_x, (B, W, K), dtype=jnp.float32)

    # torch nn.Conv1d default init: uniform(-lim, lim), lim = 1/sqrt(in_channels * ks).
    lim = 1.0 / float(jnp.sqrt(K * ksz))
    conv_weight = jax.random.uniform(k_w, (K, K, ksz), minval=-lim, maxval=lim,
                                     dtype=jnp.float32)
    conv_bias = jax.random.uniform(k_b, (K,), minval=-lim, maxval=lim,
                                   dtype=jnp.float32)

    out = conv_layer_forward(x, conv_weight, conv_bias, kernel_size=kernel_size)
    out = jax.block_until_ready(out)

    ref = _reference(x, conv_weight, conv_bias, kernel_size=kernel_size)
    assert out.shape == (B, Lout, K)
    assert jnp.allclose(out, ref, atol=1e-4, rtol=1e-4), float(jnp.max(jnp.abs(out - ref)))

    print("KERNEL_OK")
</pallas_src>

<mosaic_0001>
module attributes {stable_mosaic.version = 11 : i64} {
  func.func @_conv_relu_kernel(%arg0: i32, %arg1: memref<2x16x4xf32, #tpu.memory_space<vmem>>, %arg2: memref<24x4xf32, #tpu.memory_space<vmem>>, %arg3: memref<1x4xf32, #tpu.memory_space<vmem>>, %arg4: memref<2x17x4xf32, #tpu.memory_space<vmem>>) attributes {dimension_semantics = [#tpu.dimension_semantics<arbitrary>], iteration_bounds = array<i64: 1>, scalar_prefetch = 0 : i64, scratch_operands = 0 : i64, tpu.core_type = #tpu.core_type<tc>, window_params = [{transform_indices = @transform_0, window_bounds = array<i64: 2, 16, 4>}, {pipeline_mode = #tpu.pipeline_mode<synchronous>, transform_indices = @transform_1, window_bounds = array<i64: 24, 4>}, {pipeline_mode = #tpu.pipeline_mode<synchronous>, transform_indices = @transform_2, window_bounds = array<i64: 1, 4>}, {transform_indices = @transform_3, window_bounds = array<i64: 2, 17, 4>}]} {
    %c0 = arith.constant 0 : index
    %c0_0 = arith.constant 0 : index
    %c0_1 = arith.constant 0 : index
    %0 = vector.load %arg1[%c0, %c0_0, %c0_1] : memref<2x16x4xf32, #tpu.memory_space<vmem>>, vector<2x16x4xf32>
    %cst = arith.constant 0.000000e+00 : f32
    %1 = vector.broadcast %cst : f32 to vector<2x3x4xf32>
    %2 = tpu.concatenate %1, %0, %1 in 1 : vector<2x3x4xf32>, vector<2x16x4xf32>, vector<2x3x4xf32> -> vector<2x22x4xf32>
    %3 = vector.extract_strided_slice %2 {offsets = [0, 0, 0], sizes = [2, 17, 4], strides = [1, 1, 1]} : vector<2x22x4xf32> to vector<2x17x4xf32>
    %4 = vector.extract_strided_slice %2 {offsets = [0, 1, 0], sizes = [2, 17, 4], strides = [1, 1, 1]} : vector<2x22x4xf32> to vector<2x17x4xf32>
    %5 = vector.extract_strided_slice %2 {offsets = [0, 2, 0], sizes = [2, 17, 4], strides = [1, 1, 1]} : vector<2x22x4xf32> to vector<2x17x4xf32>
    %6 = vector.extract_strided_slice %2 {offsets = [0, 3, 0], sizes = [2, 17, 4], strides = [1, 1, 1]} : vector<2x22x4xf32> to vector<2x17x4xf32>
    %7 = vector.extract_strided_slice %2 {offsets = [0, 4, 0], sizes = [2, 17, 4], strides = [1, 1, 1]} : vector<2x22x4xf32> to vector<2x17x4xf32>
    %8 = vector.extract_strided_slice %2 {offsets = [0, 5, 0], sizes = [2, 17, 4], strides = [1, 1, 1]} : vector<2x22x4xf32> to vector<2x17x4xf32>
    %9 = tpu.concatenate %3, %4, %5, %6, %7, %8 in 2 : vector<2x17x4xf32>, vector<2x17x4xf32>, vector<2x17x4xf32>, vector<2x17x4xf32>, vector<2x17x4xf32>, vector<2x17x4xf32> -> vector<2x17x24xf32>
    %10 = vector.shape_cast %9 : vector<2x17x24xf32> to vector<34x24xf32>
    %c0_2 = arith.constant 0 : index
    %c0_3 = arith.constant 0 : index
    %11 = vector.load %arg2[%c0_2, %c0_3] : memref<24x4xf32, #tpu.memory_space<vmem>>, vector<24x4xf32>
    %cst_4 = arith.constant dense<0.000000e+00> : vector<34x4xf32>
    %12 = tpu.matmul %10, %11, %cst_4 {dimension_numbers = #tpu.dot_dimension_numbers<[1], [0], [0], [1], [0, 0, 1, 1], [], []>} : vector<34x24xf32>, vector<24x4xf32>, vector<34x4xf32> -> vector<34x4xf32>
    %c0_5 = arith.constant 0 : index
    %c0_6 = arith.constant 0 : index
    %13 = vector.load %arg3[%c0_5, %c0_6] : memref<1x4xf32, #tpu.memory_space<vmem>>, vector<1x4xf32>
    %14 = vector.broadcast %13 : vector<1x4xf32> to vector<34x4xf32>
    %15 = arith.addf %12, %14 : vector<34x4xf32>
    %cst_7 = arith.constant 0.000000e+00 : f32
    %16 = vector.broadcast %cst_7 : f32 to vector<34x4xf32>
    %17 = arith.maximumf %15, %16 : vector<34x4xf32>
    %18 = vector.shape_cast %17 : vector<34x4xf32> to vector<2x17x4xf32>
    %c0_8 = arith.constant 0 : index
    %c0_9 = arith.constant 0 : index
    %c0_10 = arith.constant 0 : index
    %19 = vector.load %arg4[%c0_8, %c0_9, %c0_10] : memref<2x17x4xf32, #tpu.memory_space<vmem>>, vector<2x17x4xf32>
    tpu.vector_store %arg4[%c0_8, %c0_9, %c0_10], %18 {strides = array<i32>} : memref<2x17x4xf32, #tpu.memory_space<vmem>>, vector<2x17x4xf32>,
    return
  }
  func.func @transform_0(%arg0: i32) -> (i32, i32, i32) {
    %c0_i32 = arith.constant 0 : i32
    %c0_i32_0 = arith.constant 0 : i32
    %c0_i32_1 = arith.constant 0 : i32
    return %arg0, %c0_i32, %c0_i32_0 : i32, i32, i32
  }
  func.func @transform_1(%arg0: i32) -> (i32, i32) {
    %c0_i32 = arith.constant 0 : i32
    %c0_i32_0 = arith.constant 0 : i32
    %c0_i32_1 = arith.constant 0 : i32
    return %c0_i32, %c0_i32_0 : i32, i32
  }
  func.func @transform_2(%arg0: i32) -> (i32, i32) {
    %c0_i32 = arith.constant 0 : i32
    %c0_i32_0 = arith.constant 0 : i32
    %c0_i32_1 = arith.constant 0 : i32
    return %c0_i32, %c0_i32_0 : i32, i32
  }
  func.func @transform_3(%arg0: i32) -> (i32, i32, i32) {
    %c0_i32 = arith.constant 0 : i32
    %c0_i32_0 = arith.constant 0 : i32
    %c0_i32_1 = arith.constant 0 : i32
    return %arg0, %c0_i32, %c0_i32_0 : i32, i32, i32
  }
}

</mosaic_0001>

<llo_original>
// kernel: tpu_custom_call.1
$region0: #{tpu_custom_call.1}
  #allocation0 [shape = 'u32[]', space=smem, size = 0x4, offset = 0x4, fixed_abs, tag = 'smem constant byte address 0x4 - core index']
  #allocation1 [shape = 'u32[144,128]{1,0:T(1,128)}', space=vmem, size = 0x12000, scoped, tag = 'internal scratch']
  %s0 = inlined_call_operand.vmem [shape: f32[2,16,4], index: 0, kind: input, shape index: {}]
  %s1 = inlined_call_operand.vmem [shape: f32[24,4], index: 1, kind: input, shape index: {}]
  %s2 = inlined_call_operand.vmem [shape: f32[1,4], index: 2, kind: input, shape index: {}]
  %s3 = inlined_call_operand.vmem [shape: f32[2,17,4], index: 3, kind: output, shape index: {}]
  %s4 = sld [smem:[#allocation0]]
  $region22: #{tpu_custom_call.1} parent=0
    _
  %s6 = ssub.s32 1, %s4
  %s7 = scalar_select 0, %s6, %s4
  // Predicated region
  $region2: #{tpu_custom_call.1} parent=0 // pred_check
    _
  $region3: #{tpu_custom_call.1} parent=0 // pred_check_branch
    %9 = sbr.rel (0) target = $region5
  $region4: #{tpu_custom_call.1} parent=0 // pred_region
    _
  $region5: #{tpu_custom_call.1} parent=0 // pred_fallthru
    _
  // Predicated region
  $region6: #{tpu_custom_call.1} parent=0 // pred_check
    _
  $region7: #{tpu_custom_call.1} parent=0 // pred_check_branch
    %11 = sbr.rel (0) target = $region9
  $region8: #{tpu_custom_call.1} parent=0 // pred_region
    _
  $region9: #{tpu_custom_call.1} parent=0 // pred_fallthru
    _
  // Predicated region
  $region10: #{tpu_custom_call.1} parent=0 // pred_check
    _
  $region11: #{tpu_custom_call.1} parent=0 // pred_check_branch
    %13 = sbr.rel (0) target = $region13
  $region12: #{tpu_custom_call.1} parent=0 // pred_region
    _
  $region13: #{tpu_custom_call.1} parent=0 // pred_fallthru
    _
  %v14 = vld [vmem:[%s0] sm:$0xff]
  %v15 = vld [vmem:[%s0 + $0x8] sm:$0xff]
  %v16 = vld [vmem:[%s0 + $0x10] sm:$0xff]
  %v17 = vld [vmem:[%s0 + $0x18] sm:$0xff]
  %vm22 = vcmask 1042432
  %v23 = vrot.slane %v14, 5
  %v24 = vrot.slane %v15, 5
  %v25 = vsel %vm22, %v23, %v24
  %v26 = vrot.slane %v16, 5
  %v27 = vrot.slane %v17, 5
  %v28 = vsel %vm22, %v26, %v27
  %v35 = vsel %vm22, 0.0, %v23
  %v36 = vsel %vm22, 0.0, %v26
  %v37 = vsel %vm22, %v24, 0.0
  %v38 = vsel %vm22, %v27, 0.0
  %vm43 = vcmask 1046528
  %v44 = vrot.slane %v35, 1
  %v45 = vrot.slane %v25, 1
  %v46 = vsel %vm43, %v44, %v45
  %v47 = vrot.slane %v37, 1
  %v48 = vsel %vm43, %v45, %v47
  %v49 = vrot.slane %v36, 1
  %v50 = vrot.slane %v28, 1
  %v51 = vsel %vm43, %v49, %v50
  %v52 = vrot.slane %v38, 1
  %v53 = vsel %vm43, %v50, %v52
  %54 = vrot.lane.b32.xlu0 %v46, 4
  %v55 = vpop.permute.xlu0 %54
  %56 = vrot.lane.b32.xlu0 %v48, 4
  %v57 = vpop.permute.xlu0 %56
  %58 = vrot.lane.b32.xlu0 %v47, 4
  %v59 = vpop.permute.xlu0 %58
  %60 = vrot.lane.b32.xlu0 %v51, 4
  %v61 = vpop.permute.xlu0 %60
  %62 = vrot.lane.b32.xlu0 %v53, 4
  %v63 = vpop.permute.xlu0 %62
  %64 = vrot.lane.b32.xlu0 %v52, 4
  %v65 = vpop.permute.xlu0 %64
  %vm72 = vcmask 1045504
  %v73 = vrot.slane %v35, 2
  %v74 = vrot.slane %v25, 2
  %v75 = vsel %vm72, %v73, %v74
  %v76 = vrot.slane %v37, 2
  %v77 = vsel %vm72, %v74, %v76
  %v78 = vrot.slane %v36, 2
  %v79 = vrot.slane %v28, 2
  %v80 = vsel %vm72, %v78, %v79
  %v81 = vrot.slane %v38, 2
  %v82 = vsel %vm72, %v79, %v81
  %83 = vrot.lane.b32.xlu0 %v75, 8
  %v84 = vpop.permute.xlu0 %83
  %85 = vrot.lane.b32.xlu0 %v77, 8
  %v86 = vpop.permute.xlu0 %85
  %87 = vrot.lane.b32.xlu0 %v76, 8
  %v88 = vpop.permute.xlu0 %87
  %89 = vrot.lane.b32.xlu0 %v80, 8
  %v90 = vpop.permute.xlu0 %89
  %91 = vrot.lane.b32.xlu0 %v82, 8
  %v92 = vpop.permute.xlu0 %91
  %93 = vrot.lane.b32.xlu0 %v81, 8
  %v94 = vpop.permute.xlu0 %93
  %vm101 = vcmask 1044480
  %v102 = vrot.slane %v35, 3
  %v103 = vrot.slane %v25, 3
  %v104 = vsel %vm101, %v102, %v103
  %v105 = vrot.slane %v37, 3
  %v106 = vsel %vm101, %v103, %v105
  %v107 = vrot.slane %v36, 3
  %v108 = vrot.slane %v28, 3
  %v109 = vsel %vm101, %v107, %v108
  %v110 = vrot.slane %v38, 3
  %v111 = vsel %vm101, %v108, %v110
  %112 = vrot.lane.b32.xlu0 %v104, 12
  %v113 = vpop.permute.xlu0 %112
  %114 = vrot.lane.b32.xlu0 %v106, 12
  %v115 = vpop.permute.xlu0 %114
  %116 = vrot.lane.b32.xlu0 %v105, 12
  %v117 = vpop.permute.xlu0 %116
  %118 = vrot.lane.b32.xlu0 %v109, 12
  %v119 = vpop.permute.xlu0 %118
  %120 = vrot.lane.b32.xlu0 %v111, 12
  %v121 = vpop.permute.xlu0 %120
  %122 = vrot.lane.b32.xlu0 %v110, 12
  %v123 = vpop.permute.xlu0 %122
  %vm130 = vcmask 1043456
  %v131 = vrot.slane %v35, 4
  %v132 = vrot.slane %v25, 4
  %v133 = vsel %vm130, %v131, %v132
  %v134 = vrot.slane %v37, 4
  %v135 = vsel %vm130, %v132, %v134
  %v136 = vrot.slane %v36, 4
  %v137 = vrot.slane %v28, 4
  %v138 = vsel %vm130, %v136, %v137
  %v139 = vrot.slane %v38, 4
  %v140 = vsel %vm130, %v137, %v139
  %141 = vrot.lane.b32.xlu0 %v133, 16
  %v142 = vpop.permute.xlu0 %141
  %143 = vrot.lane.b32.xlu0 %v135, 16
  %v144 = vpop.permute.xlu0 %143
  %145 = vrot.lane.b32.xlu0 %v134, 16
  %v146 = vpop.permute.xlu0 %145
  %147 = vrot.lane.b32.xlu0 %v138, 16
  %v148 = vpop.permute.xlu0 %147
  %149 = vrot.lane.b32.xlu0 %v140, 16
  %v150 = vpop.permute.xlu0 %149
  %151 = vrot.lane.b32.xlu0 %v139, 16
  %v152 = vpop.permute.xlu0 %151
  %v159 = vrot.slane %v35, 5
  %v160 = vrot.slane %v25, 5
  %v161 = vsel %vm22, %v159, %v160
  %v162 = vrot.slane %v37, 5
  %v163 = vsel %vm22, %v160, %v162
  %v164 = vrot.slane %v36, 5
  %v165 = vrot.slane %v28, 5
  %v166 = vsel %vm22, %v164, %v165
  %v167 = vrot.slane %v38, 5
  %v168 = vsel %vm22, %v165, %v167
  %169 = vrot.lane.b32.xlu0 %v161, 20
  %v170 = vpop.permute.xlu0 %169
  %171 = vrot.lane.b32.xlu0 %v163, 20
  %v172 = vpop.permute.xlu0 %171
  %173 = vrot.lane.b32.xlu0 %v162, 20
  %v174 = vpop.permute.xlu0 %173
  %175 = vrot.lane.b32.xlu0 %v166, 20
  %v176 = vpop.permute.xlu0 %175
  %177 = vrot.lane.b32.xlu0 %v168, 20
  %v178 = vpop.permute.xlu0 %177
  %179 = vrot.lane.b32.xlu0 %v167, 20
  %v180 = vpop.permute.xlu0 %179
  %vm187 = vcmask 31744
  %v188 = vsel %vm187, %v35, %v55
  %v189 = vsel %vm187, %v25, %v57
  %v190 = vsel %vm187, %v37, %v59
  %v191 = vsel %vm187, %v36, %v61
  %v192 = vsel %vm187, %v28, %v63
  %v193 = vsel %vm187, %v38, %v65
  %vm194 = vcmask 64512
  %v195 = vsel %vm194, %v188, %v84
  %v196 = vsel %vm194, %v189, %v86
  %v197 = vsel %vm194, %v190, %v88
  %v198 = vsel %vm194, %v191, %v90
  %v199 = vsel %vm194, %v192, %v92
  %v200 = vsel %vm194, %v193, %v94
  %vm201 = vcmask 97280
  %v202 = vsel %vm201, %v195, %v113
  %v203 = vsel %vm201, %v196, %v115
  %v204 = vsel %vm201, %v197, %v117
  %v205 = vsel %vm201, %v198, %v119
  %v206 = vsel %vm201, %v199, %v121
  %v207 = vsel %vm201, %v200, %v123
  %vm208 = vcmask 130048
  %v209 = vsel %vm208, %v202, %v142
  %v210 = vsel %vm208, %v203, %v144
  %v211 = vsel %vm208, %v204, %v146
  %v212 = vsel %vm208, %v205, %v148
  %v213 = vsel %vm208, %v206, %v150
  %v214 = vsel %vm208, %v207, %v152
  %vm215 = vcmask 162816
  %v216 = vsel %vm215, %v209, %v170
  %v217 = vsel %vm215, %v210, %v172
  %v218 = vsel %vm215, %v211, %v174
  %v219 = vsel %vm215, %v212, %v176
  %v220 = vsel %vm215, %v213, %v178
  %v221 = vsel %vm215, %v214, %v180
  %v228 = vcombine.high %v216, %v216
  %v230 = vunpack.c.l.s4 1966171168
  %v231 = vunpack.c.0.s8 %v230
  %v232 = vlaneseq
  %v233 = vshrl.u32 %v232, 7
  %v234 = vsub.s32 %v231, %v233
  %v235 = vrot.slane %v216, %v234
  %v237 = vunpack.c.l.s4 1966171168
  %v238 = vunpack.c.0.s8 %v237
  %v239 = vlaneseq
  %v240 = vshrl.u32 %v239, 7
  %v241 = vsub.s32 %v238, %v240
  %v242 = vrot.slane %v228, %v241
  %v243 = vcombine.high %v235, %v235
  %v244 = vcombine.high %v242, %v242
  %v246 = vunpack.c.l.s4 1966171168
  %v247 = vunpack.c.0.s8 %v246
  %v248 = vlaneseq
  %v249 = vshrl.u32 %v248, 7
  %v250 = vsub.s32 %v247, %v249
  %v251 = vrot.slane %v235, %v250
  %v253 = vunpack.c.l.s4 1966171168
  %v254 = vunpack.c.0.s8 %v253
  %v255 = vlaneseq
  %v256 = vshrl.u32 %v255, 7
  %v257 = vsub.s32 %v254, %v256
  %v258 = vrot.slane %v242, %v257
  %v260 = vunpack.c.l.s4 1966171168
  %v261 = vunpack.c.0.s8 %v260
  %v262 = vlaneseq
  %v263 = vshrl.u32 %v262, 7
  %v264 = vsub.s32 %v261, %v263
  %v265 = vrot.slane %v243, %v264
  %v267 = vunpack.c.l.s4 1966171168
  %v268 = vunpack.c.0.s8 %v267
  %v269 = vlaneseq
  %v270 = vshrl.u32 %v269, 7
  %v271 = vsub.s32 %v268, %v270
  %v272 = vrot.slane %v244, %v271
  %v273 = vcombine.high %v251, %v251
  %v274 = vcombine.high %v258, %v258
  %v275 = vcombine.high %v265, %v265
  %v276 = vcombine.high %v272, %v272
  %v277 = vcombine.high %v217, %v217
  %v279 = vunpack.c.l.s4 1966171168
  %v280 = vunpack.c.0.s8 %v279
  %v281 = vlaneseq
  %v282 = vshrl.u32 %v281, 7
  %v283 = vsub.s32 %v280, %v282
  %v284 = vrot.slane %v217, %v283
  %v286 = vunpack.c.l.s4 1966171168
  %v287 = vunpack.c.0.s8 %v286
  %v288 = vlaneseq
  %v289 = vshrl.u32 %v288, 7
  %v290 = vsub.s32 %v287, %v289
  %v291 = vrot.slane %v277, %v290
  %v292 = vcombine.high %v284, %v284
  %v293 = vcombine.high %v291, %v291
  %v295 = vunpack.c.l.s4 1966171168
  %v296 = vunpack.c.0.s8 %v295
  %v297 = vlaneseq
  %v298 = vshrl.u32 %v297, 7
  %v299 = vsub.s32 %v296, %v298
  %v300 = vrot.slane %v284, %v299
  %v302 = vunpack.c.l.s4 1966171168
  %v303 = vunpack.c.0.s8 %v302
  %v304 = vlaneseq
  %v305 = vshrl.u32 %v304, 7
  %v306 = vsub.s32 %v303, %v305
  %v307 = vrot.slane %v291, %v306
  %v309 = vunpack.c.l.s4 1966171168
  %v310 = vunpack.c.0.s8 %v309
  %v311 = vlaneseq
  %v312 = vshrl.u32 %v311, 7
  %v313 = vsub.s32 %v310, %v312
  %v314 = vrot.slane %v292, %v313
  %v316 = vunpack.c.l.s4 1966171168
  %v317 = vunpack.c.0.s8 %v316
  %v318 = vlaneseq
  %v319 = vshrl.u32 %v318, 7
  %v320 = vsub.s32 %v317, %v319
  %v321 = vrot.slane %v293, %v320
  %v322 = vcombine.high %v300, %v300
  %v323 = vcombine.high %v307, %v307
  %v324 = vcombine.high %v314, %v314
  %v325 = vcombine.high %v321, %v321
  %v327 = vunpack.c.l.s4 1966171168
  %v328 = vunpack.c.0.s8 %v327
  %v329 = vlaneseq
  %v330 = vshrl.u32 %v329, 7
  %v331 = vsub.s32 %v328, %v330
  %v332 = vrot.slane %v218, %v331
  %v334 = vunpack.c.l.s4 1966171168
  %v335 = vunpack.c.0.s8 %v334
  %v336 = vlaneseq
  %v337 = vshrl.u32 %v336, 7
  %v338 = vsub.s32 %v335, %v337
  %v339 = vrot.slane %v332, %v338
  %v340 = vcombine.high %v219, %v219
  %v342 = vunpack.c.l.s4 1966171168
  %v343 = vunpack.c.0.s8 %v342
  %v344 = vlaneseq
  %v345 = vshrl.u32 %v344, 7
  %v346 = vsub.s32 %v343, %v345
  %v347 = vrot.slane %v219, %v346
  %v349 = vunpack.c.l.s4 1966171168
  %v350 = vunpack.c.0.s8 %v349
  %v351 = vlaneseq
  %v352 = vshrl.u32 %v351, 7
  %v353 = vsub.s32 %v350, %v352
  %v354 = vrot.slane %v340, %v353
  %v355 = vcombine.high %v347, %v347
  %v356 = vcombine.high %v354, %v354
  %v358 = vunpack.c.l.s4 1966171168
  %v359 = vunpack.c.0.s8 %v358
  %v360 = vlaneseq
  %v361 = vshrl.u32 %v360, 7
  %v362 = vsub.s32 %v359, %v361
  %v363 = vrot.slane %v347, %v362
  %v365 = vunpack.c.l.s4 1966171168
  %v366 = vunpack.c.0.s8 %v365
  %v367 = vlaneseq
  %v368 = vshrl.u32 %v367, 7
  %v369 = vsub.s32 %v366, %v368
  %v370 = vrot.slane %v354, %v369
  %v372 = vunpack.c.l.s4 1966171168
  %v373 = vunpack.c.0.s8 %v372
  %v374 = vlaneseq
  %v375 = vshrl.u32 %v374, 7
  %v376 = vsub.s32 %v373, %v375
  %v377 = vrot.slane %v355, %v376
  %v379 = vunpack.c.l.s4 1966171168
  %v380 = vunpack.c.0.s8 %v379
  %v381 = vlaneseq
  %v382 = vshrl.u32 %v381, 7
  %v383 = vsub.s32 %v380, %v382
  %v384 = vrot.slane %v356, %v383
  %v385 = vcombine.high %v363, %v363
  %v386 = vcombine.high %v370, %v370
  %v387 = vcombine.high %v377, %v377
  %v388 = vcombine.high %v384, %v384
  %v389 = vcombine.high %v220, %v220
  %v391 = vunpack.c.l.s4 1966171168
  %v392 = vunpack.c.0.s8 %v391
  %v393 = vlaneseq
  %v394 = vshrl.u32 %v393, 7
  %v395 = vsub.s32 %v392, %v394
  %v396 = vrot.slane %v220, %v395
  %v398 = vunpack.c.l.s4 1966171168
  %v399 = vunpack.c.0.s8 %v398
  %v400 = vlaneseq
  %v401 = vshrl.u32 %v400, 7
  %v402 = vsub.s32 %v399, %v401
  %v403 = vrot.slane %v389, %v402
  %v404 = vcombine.high %v396, %v396
  %v405 = vcombine.high %v403, %v403
  %v407 = vunpack.c.l.s4 1966171168
  %v408 = vunpack.c.0.s8 %v407
  %v409 = vlaneseq
  %v410 = vshrl.u32 %v409, 7
  %v411 = vsub.s32 %v408, %v410
  %v412 = vrot.slane %v396, %v411
  %v414 = vunpack.c.l.s4 1966171168
  %v415 = vunpack.c.0.s8 %v414
  %v416 = vlaneseq
  %v417 = vshrl.u32 %v416, 7
  %v418 = vsub.s32 %v415, %v417
  %v419 = vrot.slane %v403, %v418
  %v421 = vunpack.c.l.s4 1966171168
  %v422 = vunpack.c.0.s8 %v421
  %v423 = vlaneseq
  %v424 = vshrl.u32 %v423, 7
  %v425 = vsub.s32 %v422, %v424
  %v426 = vrot.slane %v404, %v425
  %v428 = vunpack.c.l.s4 1966171168
  %v429 = vunpack.c.0.s8 %v428
  %v430 = vlaneseq
  %v431 = vshrl.u32 %v430, 7
  %v432 = vsub.s32 %v429, %v431
  %v433 = vrot.slane %v405, %v432
  %v434 = vcombine.high %v412, %v412
  %v435 = vcombine.high %v419, %v419
  %v436 = vcombine.high %v426, %v426
  %v437 = vcombine.high %v433, %v433
  %v439 = vunpack.c.l.s4 1966171168
  %v440 = vunpack.c.0.s8 %v439
  %v441 = vlaneseq
  %v442 = vshrl.u32 %v441, 7
  %v443 = vsub.s32 %v440, %v442
  %v444 = vrot.slane %v221, %v443
  %v446 = vunpack.c.l.s4 1966171168
  %v447 = vunpack.c.0.s8 %v446
  %v448 = vlaneseq
  %v449 = vshrl.u32 %v448, 7
  %v450 = vsub.s32 %v447, %v449
  %v451 = vrot.slane %v444, %v450
  %v452 = vld [vmem:[%s1] sm:$0xff]
  %v453 = vld [vmem:[%s1 + $0x8] sm:$0xff]
  %v454 = vld [vmem:[%s1 + $0x10] sm:$0xff]
  %v455 = vld [vmem:[%s2] sm:$0x1]
  %v457 = vlaneseq
  %v458 = vshrl.u32 %v457, 7
  %v459 = vsub.s32 0, %v458
  %v460 = vrot.slane %v455, %v459
  %v462 = vcombine.low %v251, %v265
  %v463 = vcombine.low %v273, %v275
  %v464 = vcombine.low %v258, %v272
  %v465 = vcombine.low %v274, %v276
  %v467 = vunpack.c.l.s4 1966171168
  %v468 = vunpack.c.0.s8 %v467
  %v469 = vlaneseq
  %v470 = vshrl.u32 %v469, 7
  %v471 = vsub.s32 %v468, %v470
  %v472 = vrot.slane %v462, %v471
  %v474 = vunpack.c.l.s4 1966171168
  %v475 = vunpack.c.0.s8 %v474
  %v476 = vlaneseq
  %v477 = vshrl.u32 %v476, 7
  %v478 = vsub.s32 %v475, %v477
  %v479 = vrot.slane %v463, %v478
  %v481 = vunpack.c.l.s4 1966171168
  %v482 = vunpack.c.0.s8 %v481
  %v483 = vlaneseq
  %v484 = vshrl.u32 %v483, 7
  %v485 = vsub.s32 %v482, %v484
  %v486 = vrot.slane %v464, %v485
  %v488 = vunpack.c.l.s4 1966171168
  %v489 = vunpack.c.0.s8 %v488
  %v490 = vlaneseq
  %v491 = vshrl.u32 %v490, 7
  %v492 = vsub.s32 %v489, %v491
  %v493 = vrot.slane %v465, %v492
  %v494 = vcombine.low %v472, %v479
  %v495 = vcombine.low %v486, %v493
  %v497 = vunpack.c.l.s4 1966171168
  %v498 = vunpack.c.0.s8 %v497
  %v499 = vlaneseq
  %v500 = vshrl.u32 %v499, 7
  %v501 = vsub.s32 %v498, %v500
  %v502 = vrot.slane %v494, %v501
  %v504 = vunpack.c.l.s4 1966171168
  %v505 = vunpack.c.0.s8 %v504
  %v506 = vlaneseq
  %v507 = vshrl.u32 %v506, 7
  %v508 = vsub.s32 %v505, %v507
  %v509 = vrot.slane %v495, %v508
  %v510 = vcombine.low %v502, %v509
  %v511 = vcombine.low %v300, %v314
  %v512 = vcombine.low %v322, %v324
  %v513 = vcombine.low %v307, %v321
  %v514 = vcombine.low %v323, %v325
  %v516 = vunpack.c.l.s4 1966171168
  %v517 = vunpack.c.0.s8 %v516
  %v518 = vlaneseq
  %v519 = vshrl.u32 %v518, 7
  %v520 = vsub.s32 %v517, %v519
  %v521 = vrot.slane %v511, %v520
  %v523 = vunpack.c.l.s4 1966171168
  %v524 = vunpack.c.0.s8 %v523
  %v525 = vlaneseq
  %v526 = vshrl.u32 %v525, 7
  %v527 = vsub.s32 %v524, %v526
  %v528 = vrot.slane %v512, %v527
  %v530 = vunpack.c.l.s4 1966171168
  %v531 = vunpack.c.0.s8 %v530
  %v532 = vlaneseq
  %v533 = vshrl.u32 %v532, 7
  %v534 = vsub.s32 %v531, %v533
  %v535 = vrot.slane %v513, %v534
  %v537 = vunpack.c.l.s4 1966171168
  %v538 = vunpack.c.0.s8 %v537
  %v539 = vlaneseq
  %v540 = vshrl.u32 %v539, 7
  %v541 = vsub.s32 %v538, %v540
  %v542 = vrot.slane %v514, %v541
  %v543 = vcombine.low %v521, %v528
  %v544 = vcombine.low %v535, %v542
  %v546 = vunpack.c.l.s4 1966171168
  %v547 = vunpack.c.0.s8 %v546
  %v548 = vlaneseq
  %v549 = vshrl.u32 %v548, 7
  %v550 = vsub.s32 %v547, %v549
  %v551 = vrot.slane %v543, %v550
  %v553 = vunpack.c.l.s4 1966171168
  %v554 = vunpack.c.0.s8 %v553
  %v555 = vlaneseq
  %v556 = vshrl.u32 %v555, 7
  %v557 = vsub.s32 %v554, %v556
  %v558 = vrot.slane %v544, %v557
  %v559 = vcombine.low %v551, %v558
  %v560 = vcombine.low %v339, %v363
  %v561 = vcombine.low %v377, %v385
  %v562 = vcombine.low %v387, %v370
  %v563 = vcombine.low %v384, %v386
  %v565 = vunpack.c.l.s4 1966171168
  %v566 = vunpack.c.0.s8 %v565
  %v567 = vlaneseq
  %v568 = vshrl.u32 %v567, 7
  %v569 = vsub.s32 %v566, %v568
  %v570 = vrot.slane %v560, %v569
  %v572 = vunpack.c.l.s4 1966171168
  %v573 = vunpack.c.0.s8 %v572
  %v574 = vlaneseq
  %v575 = vshrl.u32 %v574, 7
  %v576 = vsub.s32 %v573, %v575
  %v577 = vrot.slane %v561, %v576
  %v579 = vunpack.c.l.s4 1966171168
  %v580 = vunpack.c.0.s8 %v579
  %v581 = vlaneseq
  %v582 = vshrl.u32 %v581, 7
  %v583 = vsub.s32 %v580, %v582
  %v584 = vrot.slane %v562, %v583
  %v586 = vunpack.c.l.s4 1966171168
  %v587 = vunpack.c.0.s8 %v586
  %v588 = vlaneseq
  %v589 = vshrl.u32 %v588, 7
  %v590 = vsub.s32 %v587, %v589
  %v591 = vrot.slane %v563, %v590
  %v592 = vcombine.low %v570, %v577
  %v593 = vcombine.low %v584, %v591
  %v595 = vunpack.c.l.s4 1966171168
  %v596 = vunpack.c.0.s8 %v595
  %v597 = vlaneseq
  %v598 = vshrl.u32 %v597, 7
  %v599 = vsub.s32 %v596, %v598
  %v600 = vrot.slane %v592, %v599
  %v602 = vunpack.c.l.s4 1966171168
  %v603 = vunpack.c.0.s8 %v602
  %v604 = vlaneseq
  %v605 = vshrl.u32 %v604, 7
  %v606 = vsub.s32 %v603, %v605
  %v607 = vrot.slane %v593, %v606
  %v608 = vcombine.low %v600, %v607
  %v609 = vcombine.low %v388, %v412
  %v610 = vcombine.low %v426, %v434
  %v611 = vcombine.low %v436, %v419
  %v612 = vcombine.low %v433, %v435
  %v614 = vunpack.c.l.s4 1966171168
  %v615 = vunpack.c.0.s8 %v614
  %v616 = vlaneseq
  %v617 = vshrl.u32 %v616, 7
  %v618 = vsub.s32 %v615, %v617
  %v619 = vrot.slane %v609, %v618
  %v621 = vunpack.c.l.s4 1966171168
  %v622 = vunpack.c.0.s8 %v621
  %v623 = vlaneseq
  %v624 = vshrl.u32 %v623, 7
  %v625 = vsub.s32 %v622, %v624
  %v626 = vrot.slane %v610, %v625
  %v628 = vunpack.c.l.s4 1966171168
  %v629 = vunpack.c.0.s8 %v628
  %v630 = vlaneseq
  %v631 = vshrl.u32 %v630, 7
  %v632 = vsub.s32 %v629, %v631
  %v633 = vrot.slane %v611, %v632
  %v635 = vunpack.c.l.s4 1966171168
  %v636 = vunpack.c.0.s8 %v635
  %v637 = vlaneseq
  %v638 = vshrl.u32 %v637, 7
  %v639 = vsub.s32 %v636, %v638
  %v640 = vrot.slane %v612, %v639
  %v641 = vcombine.low %v619, %v626
  %v642 = vcombine.low %v633, %v640
  %v644 = vunpack.c.l.s4 1966171168
  %v645 = vunpack.c.0.s8 %v644
  %v646 = vlaneseq
  %v647 = vshrl.u32 %v646, 7
  %v648 = vsub.s32 %v645, %v647
  %v649 = vrot.slane %v641, %v648
  %v651 = vunpack.c.l.s4 1966171168
  %v652 = vunpack.c.0.s8 %v651
  %v653 = vlaneseq
  %v654 = vshrl.u32 %v653, 7
  %v655 = vsub.s32 %v652, %v654
  %v656 = vrot.slane %v642, %v655
  %v657 = vcombine.low %v649, %v656
  %v658 = vcombine.low %v437, %v451
  %v660 = vunpack.c.l.s4 1966171168
  %v661 = vunpack.c.0.s8 %v660
  %v662 = vlaneseq
  %v663 = vshrl.u32 %v662, 7
  %v664 = vsub.s32 %v661, %v663
  %v665 = vrot.slane %v658, %v664
  %v667 = vunpack.c.l.s4 1966171168
  %v668 = vunpack.c.0.s8 %v667
  %v669 = vlaneseq
  %v670 = vshrl.u32 %v669, 7
  %v671 = vsub.s32 %v668, %v670
  %v672 = vrot.slane %v665, %v671
  %vm673 = vcmask 195584
  %v674 = vsel %vm673, %v510, 0
  %v676 = vsel %vm673, %v559, 0
  %v678 = vsel %vm673, %v608, 0
  %v680 = vsel %vm673, %v657, 0
  %v682 = vsel %vm673, %v672, 0
  %684 = vmatprep.subr.mxu0 0.0
  %685 = vmatpush1.msra.mxu0 0.0
  %686 = vmatprep.subr.mxu0 0.0
  %687 = vmatpush1.msra.mxu0 0.0
  %688 = vmatprep.subr.mxu0 0.0
  %689 = vmatpush1.msra.mxu0 0.0
  %690 = vmatprep.subr.mxu0 0.0
  %691 = vmatpush1.msra.mxu0 0.0
  %692 = vmatprep.subr.mxu0 0.0
  %693 = vmatpush1.msra.mxu0 0.0
  %694 = vmatprep.subr.mxu0 0.0
  %695 = vmatpush1.msra.mxu0 0.0
  %696 = vmatprep.subr.mxu0 0.0
  %697 = vmatpush1.msra.mxu0 0.0
  %698 = vmatprep.subr.mxu0 0.0
  %699 = vmatpush1.msra.mxu0 0.0
  %700 = vmatprep.subr.mxu0 0.0
  %701 = vmatpush1.msra.mxu0 0.0
  %702 = vmatprep.subr.mxu0 0.0
  %703 = vmatpush1.msra.mxu0 0.0
  %704 = vmatprep.subr.mxu0 0.0
  %705 = vmatpush1.msra.mxu0 0.0
  %706 = vmatprep.subr.mxu0 0.0
  %707 = vmatpush1.msra.mxu0 0.0
  %708 = vmatprep.subr.mxu0 0.0
  %709 = vmatpush1.msra.mxu0 0.0
  %710 = vmatprep.subr.mxu0 0.0
  %711 = vmatpush1.msra.mxu0 %v454
  %712 = vmatprep.subr.mxu0 0.0
  %713 = vmatpush1.msra.mxu0 %v453
  %714 = vmatprep.subr.mxu0 0.0
  %715 = vmatpush1.msra.mxu0 %v452
  %716 = vmatprep.subr.mxu0 0.0
  %717 = vmatpush2.msra.mxu0 0.0
  %718 = vmatprep.subr.mxu0 0.0
  %719 = vmatpush2.msra.mxu0 0.0
  %720 = vmatprep.subr.mxu0 0.0
  %721 = vmatpush2.msra.mxu0 0.0
  %722 = vmatprep.subr.mxu0 0.0
  %723 = vmatpush2.msra.mxu0 0.0
  %724 = vmatprep.subr.mxu0 0.0
  %725 = vmatpush2.msra.mxu0 0.0
  %726 = vmatprep.subr.mxu0 0.0
  %727 = vmatpush2.msra.mxu0 0.0
  %728 = vmatprep.subr.mxu0 0.0
  %729 = vmatpush2.msra.mxu0 0.0
  %730 = vmatprep.subr.mxu0 0.0
  %731 = vmatpush2.msra.mxu0 0.0
  %732 = vmatprep.subr.mxu0 0.0
  %733 = vmatpush2.msra.mxu0 0.0
  %734 = vmatprep.subr.mxu0 0.0
  %735 = vmatpush2.msra.mxu0 0.0
  %736 = vmatprep.subr.mxu0 0.0
  %737 = vmatpush2.msra.mxu0 0.0
  %738 = vmatprep.subr.mxu0 0.0
  %739 = vmatpush2.msra.mxu0 0.0
  %740 = vmatprep.subr.mxu0 0.0
  %741 = vmatpush2.msra.mxu0 0.0
  %742 = vmatprep.subr.mxu0 0.0
  %743 = vmatpush2.msra.mxu0 0.0
  %744 = vmatprep.subr.mxu0 0.0
  %745 = vmatpush2.msra.mxu0 0.0
  %746 = vmatprep.subr.mxu0 0.0
  %747 = vmatpush2.msra.mxu0 0.0
  %748 = vmatprep.mubr.f32.mxu0 0.0
  %749 = vmatmul.mubr.f32.gmra.mxu0 %v674
  %v750 = vpop.f32.mrf.mxu0
  %v751 = vadd.f32 %v460, %v750
  %v752 = vpop.f32.mrf.mxu0
  %753 = vmatprep.mubr.f32.mxu0 0.0
  %754 = vmatmul.mubr.f32.gmra.mxu0 %v676
  %v755 = vpop.f32.mrf.mxu0
  %v756 = vadd.f32 %v460, %v755
  %v757 = vpop.f32.mrf.mxu0
  %758 = vmatprep.mubr.f32.mxu0 0.0
  %759 = vmatmul.mubr.f32.gmra.mxu0 %v678
  %v760 = vpop.f32.mrf.mxu0
  %v761 = vadd.f32 %v460, %v760
  %v762 = vpop.f32.mrf.mxu0
  %763 = vmatprep.mubr.f32.mxu0 0.0
  %764 = vmatmul.mubr.f32.gmra.mxu0 %v680
  %v765 = vpop.f32.mrf.mxu0
  %v766 = vadd.f32 %v460, %v765
  %v767 = vpop.f32.mrf.mxu0
  %768 = vmatprep.mubr.f32.mxu0 0.0
  %769 = vmatmul.mubr.f32.gmra.mxu0 %v682
  %v770 = vpop.f32.mrf.mxu0
  %v771 = vadd.f32 %v460, %v770
  %v772 = vpop.f32.mrf.mxu0
  %773 = vdwg.mxu0
  %v774 = vmax.f32 %v751, 0.0
  %v775 = vmax.f32 %v756, 0.0
  %v776 = vmax.f32 %v761, 0.0
  %v777 = vmax.f32 %v766, 0.0
  %v778 = vmax.f32 %v771, 0.0
  %v784 = vcombine.high %v774, %v774
  %v786 = vunpack.c.l.s4 1966171168
  %v787 = vunpack.c.0.s8 %v786
  %v788 = vlaneseq
  %v789 = vshrl.u32 %v788, 7
  %v790 = vsub.s32 %v787, %v789
  %v791 = vrot.slane %v774, %v790
  %v793 = vunpack.c.l.s4 1966171168
  %v794 = vunpack.c.0.s8 %v793
  %v795 = vlaneseq
  %v796 = vshrl.u32 %v795, 7
  %v797 = vsub.s32 %v794, %v796
  %v798 = vrot.slane %v784, %v797
  %v799 = vcombine.high %v791, %v791
  %v800 = vcombine.high %v798, %v798
  %v802 = vunpack.c.l.s4 1966171168
  %v803 = vunpack.c.0.s8 %v802
  %v804 = vlaneseq
  %v805 = vshrl.u32 %v804, 7
  %v806 = vsub.s32 %v803, %v805
  %v807 = vrot.slane %v791, %v806
  %v809 = vunpack.c.l.s4 1966171168
  %v810 = vunpack.c.0.s8 %v809
  %v811 = vlaneseq
  %v812 = vshrl.u32 %v811, 7
  %v813 = vsub.s32 %v810, %v812
  %v814 = vrot.slane %v798, %v813
  %v816 = vunpack.c.l.s4 1966171168
  %v817 = vunpack.c.0.s8 %v816
  %v818 = vlaneseq
  %v819 = vshrl.u32 %v818, 7
  %v820 = vsub.s32 %v817, %v819
  %v821 = vrot.slane %v799, %v820
  %v823 = vunpack.c.l.s4 1966171168
  %v824 = vunpack.c.0.s8 %v823
  %v825 = vlaneseq
  %v826 = vshrl.u32 %v825, 7
  %v827 = vsub.s32 %v824, %v826
  %v828 = vrot.slane %v800, %v827
  %v829 = vcombine.high %v807, %v807
  %v830 = vcombine.high %v814, %v814
  %v831 = vcombine.high %v821, %v821
  %v832 = vcombine.high %v828, %v828
  %v833 = vcombine.high %v775, %v775
  %v835 = vunpack.c.l.s4 1966171168
  %v836 = vunpack.c.0.s8 %v835
  %v837 = vlaneseq
  %v838 = vshrl.u32 %v837, 7
  %v839 = vsub.s32 %v836, %v838
  %v840 = vrot.slane %v775, %v839
  %v842 = vunpack.c.l.s4 1966171168
  %v843 = vunpack.c.0.s8 %v842
  %v844 = vlaneseq
  %v845 = vshrl.u32 %v844, 7
  %v846 = vsub.s32 %v843, %v845
  %v847 = vrot.slane %v833, %v846
  %v848 = vcombine.high %v840, %v840
  %v849 = vcombine.high %v847, %v847
  %v851 = vunpack.c.l.s4 1966171168
  %v852 = vunpack.c.0.s8 %v851
  %v853 = vlaneseq
  %v854 = vshrl.u32 %v853, 7
  %v855 = vsub.s32 %v852, %v854
  %v856 = vrot.slane %v840, %v855
  %v858 = vunpack.c.l.s4 1966171168
  %v859 = vunpack.c.0.s8 %v858
  %v860 = vlaneseq
  %v861 = vshrl.u32 %v860, 7
  %v862 = vsub.s32 %v859, %v861
  %v863 = vrot.slane %v847, %v862
  %v865 = vunpack.c.l.s4 1966171168
  %v866 = vunpack.c.0.s8 %v865
  %v867 = vlaneseq
  %v868 = vshrl.u32 %v867, 7
  %v869 = vsub.s32 %v866, %v868
  %v870 = vrot.slane %v848, %v869
  %v872 = vunpack.c.l.s4 1966171168
  %v873 = vunpack.c.0.s8 %v872
  %v874 = vlaneseq
  %v875 = vshrl.u32 %v874, 7
  %v876 = vsub.s32 %v873, %v875
  %v877 = vrot.slane %v849, %v876
  %v878 = vcombine.high %v856, %v856
  %v879 = vcombine.high %v863, %v863
  %v880 = vcombine.high %v870, %v870
  %v881 = vcombine.high %v877, %v877
  %v882 = vcombine.high %v776, %v776
  %v884 = vunpack.c.l.s4 1966171168
  %v885 = vunpack.c.0.s8 %v884
  %v886 = vlaneseq
  %v887 = vshrl.u32 %v886, 7
  %v888 = vsub.s32 %v885, %v887
  %v889 = vrot.slane %v776, %v888
  %v891 = vunpack.c.l.s4 1966171168
  %v892 = vunpack.c.0.s8 %v891
  %v893 = vlaneseq
  %v894 = vshrl.u32 %v893, 7
  %v895 = vsub.s32 %v892, %v894
  %v896 = vrot.slane %v882, %v895
  %v897 = vcombine.high %v889, %v889
  %v898 = vcombine.high %v896, %v896
  %v900 = vunpack.c.l.s4 1966171168
  %v901 = vunpack.c.0.s8 %v900
  %v902 = vlaneseq
  %v903 = vshrl.u32 %v902, 7
  %v904 = vsub.s32 %v901, %v903
  %v905 = vrot.slane %v889, %v904
  %v907 = vunpack.c.l.s4 1966171168
  %v908 = vunpack.c.0.s8 %v907
  %v909 = vlaneseq
  %v910 = vshrl.u32 %v909, 7
  %v911 = vsub.s32 %v908, %v910
  %v912 = vrot.slane %v896, %v911
  %v914 = vunpack.c.l.s4 1966171168
  %v915 = vunpack.c.0.s8 %v914
  %v916 = vlaneseq
  %v917 = vshrl.u32 %v916, 7
  %v918 = vsub.s32 %v915, %v917
  %v919 = vrot.slane %v897, %v918
  %v921 = vunpack.c.l.s4 1966171168
  %v922 = vunpack.c.0.s8 %v921
  %v923 = vlaneseq
  %v924 = vshrl.u32 %v923, 7
  %v925 = vsub.s32 %v922, %v924
  %v926 = vrot.slane %v898, %v925
  %v927 = vcombine.high %v905, %v905
  %v928 = vcombine.high %v912, %v912
  %v929 = vcombine.high %v919, %v919
  %v930 = vcombine.high %v926, %v926
  %v931 = vcombine.high %v777, %v777
  %v933 = vunpack.c.l.s4 1966171168
  %v934 = vunpack.c.0.s8 %v933
  %v935 = vlaneseq
  %v936 = vshrl.u32 %v935, 7
  %v937 = vsub.s32 %v934, %v936
  %v938 = vrot.slane %v777, %v937
  %v940 = vunpack.c.l.s4 1966171168
  %v941 = vunpack.c.0.s8 %v940
  %v942 = vlaneseq
  %v943 = vshrl.u32 %v942, 7
  %v944 = vsub.s32 %v941, %v943
  %v945 = vrot.slane %v931, %v944
  %v946 = vcombine.high %v938, %v938
  %v947 = vcombine.high %v945, %v945
  %v949 = vunpack.c.l.s4 1966171168
  %v950 = vunpack.c.0.s8 %v949
  %v951 = vlaneseq
  %v952 = vshrl.u32 %v951, 7
  %v953 = vsub.s32 %v950, %v952
  %v954 = vrot.slane %v938, %v953
  %v956 = vunpack.c.l.s4 1966171168
  %v957 = vunpack.c.0.s8 %v956
  %v958 = vlaneseq
  %v959 = vshrl.u32 %v958, 7
  %v960 = vsub.s32 %v957, %v959
  %v961 = vrot.slane %v945, %v960
  %v963 = vunpack.c.l.s4 1966171168
  %v964 = vunpack.c.0.s8 %v963
  %v965 = vlaneseq
  %v966 = vshrl.u32 %v965, 7
  %v967 = vsub.s32 %v964, %v966
  %v968 = vrot.slane %v946, %v967
  %v970 = vunpack.c.l.s4 1966171168
  %v971 = vunpack.c.0.s8 %v970
  %v972 = vlaneseq
  %v973 = vshrl.u32 %v972, 7
  %v974 = vsub.s32 %v971, %v973
  %v975 = vrot.slane %v947, %v974
  %v976 = vcombine.high %v954, %v954
  %v977 = vcombine.high %v961, %v961
  %v978 = vcombine.high %v968, %v968
  %v979 = vcombine.high %v975, %v975
  %v981 = vunpack.c.l.s4 1966171168
  %v982 = vunpack.c.0.s8 %v981
  %v983 = vlaneseq
  %v984 = vshrl.u32 %v983, 7
  %v985 = vsub.s32 %v982, %v984
  %v986 = vrot.slane %v778, %v985
  %v987 = vcombine.high %v986, %v986
  %v989 = vunpack.c.l.s4 1966171168
  %v990 = vunpack.c.0.s8 %v989
  %v991 = vlaneseq
  %v992 = vshrl.u32 %v991, 7
  %v993 = vsub.s32 %v990, %v992
  %v994 = vrot.slane %v986, %v993
  %v996 = vunpack.c.l.s4 1966171168
  %v997 = vunpack.c.0.s8 %v996
  %v998 = vlaneseq
  %v999 = vshrl.u32 %v998, 7
  %v1000 = vsub.s32 %v997, %v999
  %v1001 = vrot.slane %v987, %v1000
  %v1002 = vcombine.low %v807, %v821
  %v1003 = vcombine.low %v829, %v831
  %v1004 = vcombine.low %v814, %v828
  %v1005 = vcombine.low %v830, %v832
  %v1007 = vunpack.c.l.s4 1966171168
  %v1008 = vunpack.c.0.s8 %v1007
  %v1009 = vlaneseq
  %v1010 = vshrl.u32 %v1009, 7
  %v1011 = vsub.s32 %v1008, %v1010
  %v1012 = vrot.slane %v1002, %v1011
  %v1014 = vunpack.c.l.s4 1966171168
  %v1015 = vunpack.c.0.s8 %v1014
  %v1016 = vlaneseq
  %v1017 = vshrl.u32 %v1016, 7
  %v1018 = vsub.s32 %v1015, %v1017
  %v1019 = vrot.slane %v1003, %v1018
  %v1021 = vunpack.c.l.s4 1966171168
  %v1022 = vunpack.c.0.s8 %v1021
  %v1023 = vlaneseq
  %v1024 = vshrl.u32 %v1023, 7
  %v1025 = vsub.s32 %v1022, %v1024
  %v1026 = vrot.slane %v1004, %v1025
  %v1028 = vunpack.c.l.s4 1966171168
  %v1029 = vunpack.c.0.s8 %v1028
  %v1030 = vlaneseq
  %v1031 = vshrl.u32 %v1030, 7
  %v1032 = vsub.s32 %v1029, %v1031
  %v1033 = vrot.slane %v1005, %v1032
  %v1034 = vcombine.low %v1012, %v1019
  %v1035 = vcombine.low %v1026, %v1033
  %v1037 = vunpack.c.l.s4 1966171168
  %v1038 = vunpack.c.0.s8 %v1037
  %v1039 = vlaneseq
  %v1040 = vshrl.u32 %v1039, 7
  %v1041 = vsub.s32 %v1038, %v1040
  %v1042 = vrot.slane %v1034, %v1041
  %v1044 = vunpack.c.l.s4 1966171168
  %v1045 = vunpack.c.0.s8 %v1044
  %v1046 = vlaneseq
  %v1047 = vshrl.u32 %v1046, 7
  %v1048 = vsub.s32 %v1045, %v1047
  %v1049 = vrot.slane %v1035, %v1048
  %v1050 = vcombine.low %v1042, %v1049
  %v1051 = vcombine.low %v856, %v870
  %v1052 = vcombine.low %v878, %v880
  %v1053 = vcombine.low %v863, %v877
  %v1054 = vcombine.low %v879, %v881
  %v1056 = vunpack.c.l.s4 1966171168
  %v1057 = vunpack.c.0.s8 %v1056
  %v1058 = vlaneseq
  %v1059 = vshrl.u32 %v1058, 7
  %v1060 = vsub.s32 %v1057, %v1059
  %v1061 = vrot.slane %v1051, %v1060
  %v1063 = vunpack.c.l.s4 1966171168
  %v1064 = vunpack.c.0.s8 %v1063
  %v1065 = vlaneseq
  %v1066 = vshrl.u32 %v1065, 7
  %v1067 = vsub.s32 %v1064, %v1066
  %v1068 = vrot.slane %v1052, %v1067
  %v1070 = vunpack.c.l.s4 1966171168
  %v1071 = vunpack.c.0.s8 %v1070
  %v1072 = vlaneseq
  %v1073 = vshrl.u32 %v1072, 7
  %v1074 = vsub.s32 %v1071, %v1073
  %v1075 = vrot.slane %v1053, %v1074
  %v1077 = vunpack.c.l.s4 1966171168
  %v1078 = vunpack.c.0.s8 %v1077
  %v1079 = vlaneseq
  %v1080 = vshrl.u32 %v1079, 7
  %v1081 = vsub.s32 %v1078, %v1080
  %v1082 = vrot.slane %v1054, %v1081
  %v1083 = vcombine.low %v1061, %v1068
  %v1084 = vcombine.low %v1075, %v1082
  %v1086 = vunpack.c.l.s4 1966171168
  %v1087 = vunpack.c.0.s8 %v1086
  %v1088 = vlaneseq
  %v1089 = vshrl.u32 %v1088, 7
  %v1090 = vsub.s32 %v1087, %v1089
  %v1091 = vrot.slane %v1083, %v1090
  %v1093 = vunpack.c.l.s4 1966171168
  %v1094 = vunpack.c.0.s8 %v1093
  %v1095 = vlaneseq
  %v1096 = vshrl.u32 %v1095, 7
  %v1097 = vsub.s32 %v1094, %v1096
  %v1098 = vrot.slane %v1084, %v1097
  %v1099 = vcombine.low %v1091, %v1098
  %v1101 = vunpack.c.l.s4 1966171168
  %v1102 = vunpack.c.0.s8 %v1101
  %v1103 = vlaneseq
  %v1104 = vshrl.u32 %v1103, 7
  %v1105 = vsub.s32 %v1102, %v1104
  %v1106 = vrot.slane %v905, %v1105
  %v1108 = vunpack.c.l.s4 1966171168
  %v1109 = vunpack.c.0.s8 %v1108
  %v1110 = vlaneseq
  %v1111 = vshrl.u32 %v1110, 7
  %v1112 = vsub.s32 %v1109, %v1111
  %v1113 = vrot.slane %v1106, %v1112
  %v1114 = vcombine.low %v919, %v927
  %v1115 = vcombine.low %v929, %v912
  %v1116 = vcombine.low %v926, %v928
  %v1117 = vcombine.low %v930, %v954
  %v1119 = vunpack.c.l.s4 1966171168
  %v1120 = vunpack.c.0.s8 %v1119
  %v1121 = vlaneseq
  %v1122 = vshrl.u32 %v1121, 7
  %v1123 = vsub.s32 %v1120, %v1122
  %v1124 = vrot.slane %v1114, %v1123
  %v1126 = vunpack.c.l.s4 1966171168
  %v1127 = vunpack.c.0.s8 %v1126
  %v1128 = vlaneseq
  %v1129 = vshrl.u32 %v1128, 7
  %v1130 = vsub.s32 %v1127, %v1129
  %v1131 = vrot.slane %v1115, %v1130
  %v1133 = vunpack.c.l.s4 1966171168
  %v1134 = vunpack.c.0.s8 %v1133
  %v1135 = vlaneseq
  %v1136 = vshrl.u32 %v1135, 7
  %v1137 = vsub.s32 %v1134, %v1136
  %v1138 = vrot.slane %v1116, %v1137
  %v1140 = vunpack.c.l.s4 1966171168
  %v1141 = vunpack.c.0.s8 %v1140
  %v1142 = vlaneseq
  %v1143 = vshrl.u32 %v1142, 7
  %v1144 = vsub.s32 %v1141, %v1143
  %v1145 = vrot.slane %v1117, %v1144
  %v1146 = vcombine.low %v1124, %v1131
  %v1147 = vcombine.low %v1138, %v1145
  %v1149 = vunpack.c.l.s4 1966171168
  %v1150 = vunpack.c.0.s8 %v1149
  %v1151 = vlaneseq
  %v1152 = vshrl.u32 %v1151, 7
  %v1153 = vsub.s32 %v1150, %v1152
  %v1154 = vrot.slane %v1146, %v1153
  %v1156 = vunpack.c.l.s4 1966171168
  %v1157 = vunpack.c.0.s8 %v1156
  %v1158 = vlaneseq
  %v1159 = vshrl.u32 %v1158, 7
  %v1160 = vsub.s32 %v1157, %v1159
  %v1161 = vrot.slane %v1147, %v1160
  %v1162 = vcombine.low %v1154, %v1161
  %v1163 = vcombine.low %v968, %v976
  %v1164 = vcombine.low %v978, %v961
  %v1165 = vcombine.low %v975, %v977
  %v1166 = vcombine.low %v979, %v994
  %v1168 = vunpack.c.l.s4 1966171168
  %v1169 = vunpack.c.0.s8 %v1168
  %v1170 = vlaneseq
  %v1171 = vshrl.u32 %v1170, 7
  %v1172 = vsub.s32 %v1169, %v1171
  %v1173 = vrot.slane %v1163, %v1172
  %v1175 = vunpack.c.l.s4 1966171168
  %v1176 = vunpack.c.0.s8 %v1175
  %v1177 = vlaneseq
  %v1178 = vshrl.u32 %v1177, 7
  %v1179 = vsub.s32 %v1176, %v1178
  %v1180 = vrot.slane %v1164, %v1179
  %v1182 = vunpack.c.l.s4 1966171168
  %v1183 = vunpack.c.0.s8 %v1182
  %v1184 = vlaneseq
  %v1185 = vshrl.u32 %v1184, 7
  %v1186 = vsub.s32 %v1183, %v1185
  %v1187 = vrot.slane %v1165, %v1186
  %v1189 = vunpack.c.l.s4 1966171168
  %v1190 = vunpack.c.0.s8 %v1189
  %v1191 = vlaneseq
  %v1192 = vshrl.u32 %v1191, 7
  %v1193 = vsub.s32 %v1190, %v1192
  %v1194 = vrot.slane %v1166, %v1193
  %v1195 = vcombine.low %v1173, %v1180
  %v1196 = vcombine.low %v1187, %v1194
  %v1198 = vunpack.c.l.s4 1966171168
  %v1199 = vunpack.c.0.s8 %v1198
  %v1200 = vlaneseq
  %v1201 = vshrl.u32 %v1200, 7
  %v1202 = vsub.s32 %v1199, %v1201
  %v1203 = vrot.slane %v1195, %v1202
  %v1205 = vunpack.c.l.s4 1966171168
  %v1206 = vunpack.c.0.s8 %v1205
  %v1207 = vlaneseq
  %v1208 = vshrl.u32 %v1207, 7
  %v1209 = vsub.s32 %v1206, %v1208
  %v1210 = vrot.slane %v1196, %v1209
  %v1211 = vcombine.low %v1203, %v1210
  %v1213 = vunpack.c.l.s4 1966171168
  %v1214 = vunpack.c.0.s8 %v1213
  %v1215 = vlaneseq
  %v1216 = vshrl.u32 %v1215, 7
  %v1217 = vsub.s32 %v1214, %v1216
  %v1218 = vrot.slane %v1001, %v1217
  %v1220 = vunpack.c.l.s4 1966171168
  %v1221 = vunpack.c.0.s8 %v1220
  %v1222 = vlaneseq
  %v1223 = vshrl.u32 %v1222, 7
  %v1224 = vsub.s32 %v1221, %v1223
  %v1225 = vrot.slane %v1218, %v1224
  %1232 = vst.msk [vmem:[%s3] sm:$0xff] %vm187, %v1050
  %1233 = vst.msk [vmem:[%s3 + $0x8] sm:$0xff] %vm187, %v1099
  %vm1234 = vcmask 24576
  %1235 = vst.msk [vmem:[%s3 + $0x10] sm:$0x1] %vm1234, %v1113
  %1236 = vst.msk [vmem:[%s3 + $0x18] sm:$0xff] %vm187, %v1162
  %1237 = vst.msk [vmem:[%s3 + $0x20] sm:$0xff] %vm187, %v1211
  %1238 = vst.msk [vmem:[%s3 + $0x28] sm:$0x1] %vm1234, %v1225
  // Predicated region
  $region14: #{tpu_custom_call.1} parent=0 // pred_check
    _
  $region15: #{tpu_custom_call.1} parent=0 // pred_check_branch
    %1240 = sbr.rel (0) target = $region17
  $region16: #{tpu_custom_call.1} parent=0 // pred_region
    _
  $region17: #{tpu_custom_call.1} parent=0 // pred_fallthru
    _
  // Predicated region
  $region18: #{tpu_custom_call.1} parent=0 // pred_check
    _
  $region19: #{tpu_custom_call.1} parent=0 // pred_check_branch
    %1242 = sbr.rel (0) target = $region21
  $region20: #{tpu_custom_call.1} parent=0 // pred_region
    _
  $region21: #{tpu_custom_call.1} parent=0 // pred_fallthru
    _

</llo_original>
